<compile_context>
chip_gen: v5e
topology: v5e:2x2
jax: 0.10.0
libtpu: 0.0.40
codegen_flags: <defaults>
</compile_context>

<pallas_src>
import functools

import jax
import jax.numpy as jnp
import numpy as np
from jax.experimental import pallas as pl
from jax.experimental.pallas import tpu as pltpu


# ----------------------------------------------------------------------------
# Parameter initialization (deterministic, mirrors init_weights_ortho:
# orthogonal weights scaled by sqrt(2), zero biases).
# ----------------------------------------------------------------------------
def _orthogonal(key, out_features, in_features, gain):
    # PyTorch orthogonal_ on a (out, in) matrix: rows/cols orthonormal.
    a = jax.random.normal(key, (out_features, in_features), dtype=jnp.float32)
    if out_features < in_features:
        q, r = jnp.linalg.qr(a.T)
        q = q.T
    else:
        q, r = jnp.linalg.qr(a)
    d = jnp.sign(jnp.diag(r))
    q = q * d[None, :] if out_features >= in_features else q * d[:, None]
    return gain * q[:out_features, :in_features]


def init_model_params(key, obs_space):
    d = obs_space + 1
    gain = np.sqrt(2.0)
    k1, k2, k3 = jax.random.split(key, 3)
    # PyTorch Linear layout: weight (out, in), bias stored as (out, 1).
    w1 = _orthogonal(k1, 64, d, gain)            # (64, d)
    b1 = jnp.zeros((64, 1), jnp.float32)
    w2 = _orthogonal(k2, 64, 64, gain)           # (64, 64)
    b2 = jnp.zeros((64, 1), jnp.float32)
    w3 = _orthogonal(k3, d, 64, gain)            # (d, 64)
    b3 = jnp.zeros((d, 1), jnp.float32)
    return (w1, b1, w2, b2, w3, b3)


# ----------------------------------------------------------------------------
# Pallas kernel: fused 3-layer MLP, feature-major (lane axis = batch).
# ----------------------------------------------------------------------------
def _mlp_kernel(xT_ref, w1_ref, b1_ref, w2_ref, b2_ref, w3_ref, b3_ref, oT_ref):
    xT = xT_ref[...]                                           # (d_in, bn)
    h1 = jnp.tanh(
        jnp.dot(w1_ref[...], xT, preferred_element_type=jnp.float32)
        + b1_ref[...]
    )                                                          # (64, bn)
    h2 = jnp.tanh(
        jnp.dot(w2_ref[...], h1, preferred_element_type=jnp.float32)
        + b2_ref[...]
    )                                                          # (64, bn)
    oT_ref[...] = (
        jnp.dot(w3_ref[...], h2, preferred_element_type=jnp.float32)
        + b3_ref[...]
    ).astype(oT_ref.dtype)                                     # (d_out, bn)


def _round_up(n, m):
    return ((n + m - 1) // m) * m


@functools.partial(jax.jit, static_argnames=("block_n",))
def model_forward(x, params, block_n=1024):
    """x: (batch, obs_space+1) f32 -> (batch, obs_space+1) f32."""
    w1, b1, w2, b2, w3, b3 = params
    batch, d_in = x.shape
    hidden = w1.shape[0]
    d_out = w3.shape[0]

    # Lane-dense batch tile: multiple of 128 along the lane (batch) axis.
    bn = _round_up(min(block_n, _round_up(batch, 128)), 128)
    padded = _round_up(batch, bn)
    grid = padded // bn

    # Feature-major layout (layout plumbing only; a caller that already keeps
    # x feature-major can skip these transposes entirely).
    xT = x.T                                                   # (d_in, batch)
    if padded != batch:
        xT = jnp.pad(xT, ((0, 0), (0, padded - batch)))

    # Weights/biases use full-array blocks resident in VMEM; xT / outT are
    # tiled over the lane (batch) axis only and auto double-buffered.
    # (pipeline_mode=pl.Buffered(3) on xT/outT is a further knob if DMA is
    # still exposed at 2-deep buffering; buffers are only bn*d*4 B each.)
    outT = pl.pallas_call(
        _mlp_kernel,
        out_shape=jax.ShapeDtypeStruct((d_out, padded), jnp.float32),
        grid_spec=pltpu.PrefetchScalarGridSpec(
            num_scalar_prefetch=0,
            grid=(grid,),
            in_specs=[
                pl.BlockSpec((d_in, bn), lambda i: (0, i)),
                pl.BlockSpec((hidden, d_in), lambda i: (0, 0)),
                pl.BlockSpec((hidden, 1), lambda i: (0, 0)),
                pl.BlockSpec((hidden, hidden), lambda i: (0, 0)),
                pl.BlockSpec((hidden, 1), lambda i: (0, 0)),
                pl.BlockSpec((d_out, hidden), lambda i: (0, 0)),
                pl.BlockSpec((d_out, 1), lambda i: (0, 0)),
            ],
            out_specs=pl.BlockSpec((d_out, bn), lambda i: (0, i)),
        ),
        compiler_params=pltpu.CompilerParams(
            dimension_semantics=("parallel",),   # megacore-shardable grid axis
        ),
    )(xT, w1, b1, w2, b2, w3, b3)

    return outT[:, :batch].T


# ----------------------------------------------------------------------------
# Pure-JAX reference for correctness checking.
# ----------------------------------------------------------------------------
def model_forward_ref(x, params):
    w1, b1, w2, b2, w3, b3 = params
    h1 = jnp.tanh(x @ w1.T + b1.T)
    h2 = jnp.tanh(h1 @ w2.T + b2.T)
    return h2 @ w3.T + b3.T


if __name__ == "__main__":
    obs_space = 7          # -> input/output feature dim = obs_space + 1 = 8

    key = jax.random.PRNGKey(0)
    k_params, k_x1, k_x2 = jax.random.split(key, 3)
    params = init_model_params(k_params, obs_space)

    # Case 1: tiny batch (padded internally up to one 128-lane tile).
    x1 = jax.random.normal(k_x1, (8, obs_space + 1), dtype=jnp.float32)
    out1 = jax.block_until_ready(model_forward(x1, params))
    assert out1.shape == (8, obs_space + 1)
    np.testing.assert_allclose(
        np.asarray(out1), np.asarray(model_forward_ref(x1, params)),
        rtol=1e-5, atol=1e-5)

    # Case 2: non-multiple batch with a multi-step grid (300 -> 3 tiles of 128,
    # padded tail) to exercise tiling/pipelining and the padding path.
    x2 = jax.random.normal(k_x2, (300, obs_space + 1), dtype=jnp.float32)
    out2 = jax.block_until_ready(model_forward(x2, params, block_n=128))
    assert out2.shape == (300, obs_space + 1)
    np.testing.assert_allclose(
        np.asarray(out2), np.asarray(model_forward_ref(x2, params)),
        rtol=1e-5, atol=1e-5)

    print("KERNEL_OK")
</pallas_src>

<mosaic_0001>
module attributes {stable_mosaic.version = 11 : i64} {
  func.func @_mlp_kernel(%arg0: i32, %arg1: memref<8x128xf32, #tpu.memory_space<vmem>>, %arg2: memref<64x8xf32, #tpu.memory_space<vmem>>, %arg3: memref<64x1xf32, #tpu.memory_space<vmem>>, %arg4: memref<64x64xf32, #tpu.memory_space<vmem>>, %arg5: memref<64x1xf32, #tpu.memory_space<vmem>>, %arg6: memref<8x64xf32, #tpu.memory_space<vmem>>, %arg7: memref<8x1xf32, #tpu.memory_space<vmem>>, %arg8: memref<8x128xf32, #tpu.memory_space<vmem>>) attributes {dimension_semantics = [#tpu.dimension_semantics<parallel>], iteration_bounds = array<i64: 1>, scalar_prefetch = 0 : i64, scratch_operands = 0 : i64, tpu.core_type = #tpu.core_type<tc>, window_params = [{transform_indices = @transform_0, window_bounds = array<i64: 8, 128>}, {pipeline_mode = #tpu.pipeline_mode<synchronous>, transform_indices = @transform_1, window_bounds = array<i64: 64, 8>}, {pipeline_mode = #tpu.pipeline_mode<synchronous>, transform_indices = @transform_2, window_bounds = array<i64: 64, 1>}, {pipeline_mode = #tpu.pipeline_mode<synchronous>, transform_indices = @transform_3, window_bounds = array<i64: 64, 64>}, {pipeline_mode = #tpu.pipeline_mode<synchronous>, transform_indices = @transform_4, window_bounds = array<i64: 64, 1>}, {pipeline_mode = #tpu.pipeline_mode<synchronous>, transform_indices = @transform_5, window_bounds = array<i64: 8, 64>}, {pipeline_mode = #tpu.pipeline_mode<synchronous>, transform_indices = @transform_6, window_bounds = array<i64: 8, 1>}, {transform_indices = @transform_7, window_bounds = array<i64: 8, 128>}]} {
    %c0 = arith.constant 0 : index
    %c0_0 = arith.constant 0 : index
    %0 = vector.load %arg1[%c0, %c0_0] : memref<8x128xf32, #tpu.memory_space<vmem>>, vector<8x128xf32>
    %c0_1 = arith.constant 0 : index
    %c0_2 = arith.constant 0 : index
    %1 = vector.load %arg2[%c0_1, %c0_2] : memref<64x8xf32, #tpu.memory_space<vmem>>, vector<64x8xf32>
    %cst = arith.constant dense<0.000000e+00> : vector<64x128xf32>
    %2 = tpu.matmul %1, %0, %cst {dimension_numbers = #tpu.dot_dimension_numbers<[1], [0], [0], [1], [0, 0, 1, 1], [], []>} : vector<64x8xf32>, vector<8x128xf32>, vector<64x128xf32> -> vector<64x128xf32>
    %c0_3 = arith.constant 0 : index
    %c0_4 = arith.constant 0 : index
    %3 = vector.load %arg3[%c0_3, %c0_4] : memref<64x1xf32, #tpu.memory_space<vmem>>, vector<64x1xf32>
    %4 = vector.broadcast %3 : vector<64x1xf32> to vector<64x128xf32>
    %5 = arith.addf %2, %4 : vector<64x128xf32>
    %6 = math.tanh %5 : vector<64x128xf32>
    %c0_5 = arith.constant 0 : index
    %c0_6 = arith.constant 0 : index
    %7 = vector.load %arg4[%c0_5, %c0_6] : memref<64x64xf32, #tpu.memory_space<vmem>>, vector<64x64xf32>
    %cst_7 = arith.constant dense<0.000000e+00> : vector<64x128xf32>
    %8 = tpu.matmul %7, %6, %cst_7 {dimension_numbers = #tpu.dot_dimension_numbers<[1], [0], [0], [1], [0, 0, 1, 1], [], []>} : vector<64x64xf32>, vector<64x128xf32>, vector<64x128xf32> -> vector<64x128xf32>
    %c0_8 = arith.constant 0 : index
    %c0_9 = arith.constant 0 : index
    %9 = vector.load %arg5[%c0_8, %c0_9] : memref<64x1xf32, #tpu.memory_space<vmem>>, vector<64x1xf32>
    %10 = vector.broadcast %9 : vector<64x1xf32> to vector<64x128xf32>
    %11 = arith.addf %8, %10 : vector<64x128xf32>
    %12 = math.tanh %11 : vector<64x128xf32>
    %c0_10 = arith.constant 0 : index
    %c0_11 = arith.constant 0 : index
    %13 = vector.load %arg6[%c0_10, %c0_11] : memref<8x64xf32, #tpu.memory_space<vmem>>, vector<8x64xf32>
    %cst_12 = arith.constant dense<0.000000e+00> : vector<8x128xf32>
    %14 = tpu.matmul %13, %12, %cst_12 {dimension_numbers = #tpu.dot_dimension_numbers<[1], [0], [0], [1], [0, 0, 1, 1], [], []>} : vector<8x64xf32>, vector<64x128xf32>, vector<8x128xf32> -> vector<8x128xf32>
    %c0_13 = arith.constant 0 : index
    %c0_14 = arith.constant 0 : index
    %15 = vector.load %arg7[%c0_13, %c0_14] : memref<8x1xf32, #tpu.memory_space<vmem>>, vector<8x1xf32>
    %16 = vector.broadcast %15 : vector<8x1xf32> to vector<8x128xf32>
    %17 = arith.addf %14, %16 : vector<8x128xf32>
    %c0_15 = arith.constant 0 : index
    %c0_16 = arith.constant 0 : index
    %18 = vector.load %arg8[%c0_15, %c0_16] : memref<8x128xf32, #tpu.memory_space<vmem>>, vector<8x128xf32>
    tpu.vector_store %arg8[%c0_15, %c0_16], %17 {strides = array<i32>} : memref<8x128xf32, #tpu.memory_space<vmem>>, vector<8x128xf32>,
    return
  }
  func.func @transform_0(%arg0: i32) -> (i32, i32) {
    %c0_i32 = arith.constant 0 : i32
    %c0_i32_0 = arith.constant 0 : i32
    return %c0_i32, %arg0 : i32, i32
  }
  func.func @transform_1(%arg0: i32) -> (i32, i32) {
    %c0_i32 = arith.constant 0 : i32
    %c0_i32_0 = arith.constant 0 : i32
    %c0_i32_1 = arith.constant 0 : i32
    return %c0_i32, %c0_i32_0 : i32, i32
  }
  func.func @transform_2(%arg0: i32) -> (i32, i32) {
    %c0_i32 = arith.constant 0 : i32
    %c0_i32_0 = arith.constant 0 : i32
    %c0_i32_1 = arith.constant 0 : i32
    return %c0_i32, %c0_i32_0 : i32, i32
  }
  func.func @transform_3(%arg0: i32) -> (i32, i32) {
    %c0_i32 = arith.constant 0 : i32
    %c0_i32_0 = arith.constant 0 : i32
    %c0_i32_1 = arith.constant 0 : i32
    return %c0_i32, %c0_i32_0 : i32, i32
  }
  func.func @transform_4(%arg0: i32) -> (i32, i32) {
    %c0_i32 = arith.constant 0 : i32
    %c0_i32_0 = arith.constant 0 : i32
    %c0_i32_1 = arith.constant 0 : i32
    return %c0_i32, %c0_i32_0 : i32, i32
  }
  func.func @transform_5(%arg0: i32) -> (i32, i32) {
    %c0_i32 = arith.constant 0 : i32
    %c0_i32_0 = arith.constant 0 : i32
    %c0_i32_1 = arith.constant 0 : i32
    return %c0_i32, %c0_i32_0 : i32, i32
  }
  func.func @transform_6(%arg0: i32) -> (i32, i32) {
    %c0_i32 = arith.constant 0 : i32
    %c0_i32_0 = arith.constant 0 : i32
    %c0_i32_1 = arith.constant 0 : i32
    return %c0_i32, %c0_i32_0 : i32, i32
  }
  func.func @transform_7(%arg0: i32) -> (i32, i32) {
    %c0_i32 = arith.constant 0 : i32
    %c0_i32_0 = arith.constant 0 : i32
    return %c0_i32, %arg0 : i32, i32
  }
}

</mosaic_0001>

<llo_original>
// kernel: model_forward.1
$region0: #{model_forward.1}
  #allocation0 [shape = 'u32[]', space=smem, size = 0x4, offset = 0x4, fixed_abs, tag = 'smem constant byte address 0x4 - core index']
  #allocation1 [shape = 'u32[72,128]{1,0:T(1,128)}', space=vmem, size = 0x9000, scoped, tag = 'internal scratch']
  %s0 = inlined_call_operand.vmem [shape: f32[8,128], index: 0, kind: input, shape index: {}]
  %s1 = inlined_call_operand.vmem [shape: f32[64,8], index: 1, kind: input, shape index: {}]
  %s2 = inlined_call_operand.vmem [shape: f32[64,1], index: 2, kind: input, shape index: {}]
  %s3 = inlined_call_operand.vmem [shape: f32[64,64], index: 3, kind: input, shape index: {}]
  %s4 = inlined_call_operand.vmem [shape: f32[64,1], index: 4, kind: input, shape index: {}]
  %s5 = inlined_call_operand.vmem [shape: f32[8,64], index: 5, kind: input, shape index: {}]
  %s6 = inlined_call_operand.vmem [shape: f32[8,1], index: 6, kind: input, shape index: {}]
  %s7 = inlined_call_operand.vmem [shape: f32[8,128], index: 7, kind: output, shape index: {}]
  %s8 = sld [smem:[#allocation0]]
  $region38: #{model_forward.1} parent=0
    _
  %s10 = ssub.s32 1, %s8
  %s11 = scalar_select 0, %s10, %s8
  // Predicated region
  $region2: #{model_forward.1} parent=0 // pred_check
    _
  $region3: #{model_forward.1} parent=0 // pred_check_branch
    %13 = sbr.rel (0) target = $region5
  $region4: #{model_forward.1} parent=0 // pred_region
    _
  $region5: #{model_forward.1} parent=0 // pred_fallthru
    _
  // Predicated region
  $region6: #{model_forward.1} parent=0 // pred_check
    _
  $region7: #{model_forward.1} parent=0 // pred_check_branch
    %15 = sbr.rel (0) target = $region9
  $region8: #{model_forward.1} parent=0 // pred_region
    _
  $region9: #{model_forward.1} parent=0 // pred_fallthru
    _
  // Predicated region
  $region10: #{model_forward.1} parent=0 // pred_check
    _
  $region11: #{model_forward.1} parent=0 // pred_check_branch
    %17 = sbr.rel (0) target = $region13
  $region12: #{model_forward.1} parent=0 // pred_region
    _
  $region13: #{model_forward.1} parent=0 // pred_fallthru
    _
  // Predicated region
  $region14: #{model_forward.1} parent=0 // pred_check
    _
  $region15: #{model_forward.1} parent=0 // pred_check_branch
    %19 = sbr.rel (0) target = $region17
  $region16: #{model_forward.1} parent=0 // pred_region
    _
  $region17: #{model_forward.1} parent=0 // pred_fallthru
    _
  // Predicated region
  $region18: #{model_forward.1} parent=0 // pred_check
    _
  $region19: #{model_forward.1} parent=0 // pred_check_branch
    %21 = sbr.rel (0) target = $region21
  $region20: #{model_forward.1} parent=0 // pred_region
    _
  $region21: #{model_forward.1} parent=0 // pred_fallthru
    _
  // Predicated region
  $region22: #{model_forward.1} parent=0 // pred_check
    _
  $region23: #{model_forward.1} parent=0 // pred_check_branch
    %23 = sbr.rel (0) target = $region25
  $region24: #{model_forward.1} parent=0 // pred_region
    _
  $region25: #{model_forward.1} parent=0 // pred_fallthru
    _
  // Predicated region
  $region26: #{model_forward.1} parent=0 // pred_check
    _
  $region27: #{model_forward.1} parent=0 // pred_check_branch
    %25 = sbr.rel (0) target = $region29
  $region28: #{model_forward.1} parent=0 // pred_region
    _
  $region29: #{model_forward.1} parent=0 // pred_fallthru
    _
  %v26 = vld [vmem:[%s0] sm:$0xff]
  %v27 = vld [vmem:[%s1] sm:$0xff]
  %v28 = vld [vmem:[%s1 + $0x8] sm:$0xff]
  %v29 = vld [vmem:[%s1 + $0x10] sm:$0xff]
  %v30 = vld [vmem:[%s1 + $0x18] sm:$0xff]
  %v31 = vld [vmem:[%s1 + $0x20] sm:$0xff]
  %v32 = vld [vmem:[%s1 + $0x28] sm:$0xff]
  %v33 = vld [vmem:[%s1 + $0x30] sm:$0xff]
  %v34 = vld [vmem:[%s1 + $0x38] sm:$0xff]
  %v35 = vld [vmem:[%s2] sm:$0xff]
  %v36 = vld [vmem:[%s2 + $0x8] sm:$0xff]
  %v37 = vld [vmem:[%s2 + $0x10] sm:$0xff]
  %v38 = vld [vmem:[%s2 + $0x18] sm:$0xff]
  %v39 = vld [vmem:[%s2 + $0x20] sm:$0xff]
  %v40 = vld [vmem:[%s2 + $0x28] sm:$0xff]
  %v41 = vld [vmem:[%s2 + $0x30] sm:$0xff]
  %v42 = vld [vmem:[%s2 + $0x38] sm:$0xff]
  %44 = vset.pattern.permute.xlu0 0
  %45 = vperm.xlu0 %44, %v35
  %v46 = vpop.permute.xlu0 %45
  %49 = vset.pattern.permute.xlu0 0
  %50 = vperm.xlu0 %49, %v36
  %v51 = vpop.permute.xlu0 %50
  %54 = vset.pattern.permute.xlu0 0
  %55 = vperm.xlu0 %54, %v37
  %v56 = vpop.permute.xlu0 %55
  %59 = vset.pattern.permute.xlu0 0
  %60 = vperm.xlu0 %59, %v38
  %v61 = vpop.permute.xlu0 %60
  %64 = vset.pattern.permute.xlu0 0
  %65 = vperm.xlu0 %64, %v39
  %v66 = vpop.permute.xlu0 %65
  %69 = vset.pattern.permute.xlu0 0
  %70 = vperm.xlu0 %69, %v40
  %v71 = vpop.permute.xlu0 %70
  %74 = vset.pattern.permute.xlu0 0
  %75 = vperm.xlu0 %74, %v41
  %v76 = vpop.permute.xlu0 %75
  %79 = vset.pattern.permute.xlu0 0
  %80 = vperm.xlu0 %79, %v42
  %v81 = vpop.permute.xlu0 %80
  %vm83 = vcmask 64512
  %v85 = vsel %vm83, %v27, 0
  %v88 = vsel %vm83, %v28, 0
  %v91 = vsel %vm83, %v29, 0
  %v94 = vsel %vm83, %v30, 0
  %v97 = vsel %vm83, %v31, 0
  %v100 = vsel %vm83, %v32, 0
  %v103 = vsel %vm83, %v33, 0
  %v106 = vsel %vm83, %v34, 0
  %108 = vmatpush.msra.mxu0 0.0
  %109 = vmatpush.msra.mxu0 0.0
  %110 = vmatpush.msra.mxu0 0.0
  %111 = vmatpush.msra.mxu0 0.0
  %112 = vmatpush.msra.mxu0 0.0
  %113 = vmatpush.msra.mxu0 0.0
  %114 = vmatpush.msra.mxu0 0.0
  %115 = vmatpush.msra.mxu0 0.0
  %116 = vmatpush.msra.mxu0 0.0
  %117 = vmatpush.msra.mxu0 0.0
  %118 = vmatpush.msra.mxu0 0.0
  %119 = vmatpush.msra.mxu0 0.0
  %120 = vmatpush.msra.mxu0 0.0
  %121 = vmatpush.msra.mxu0 0.0
  %122 = vmatpush.msra.mxu0 0.0
  %123 = vmatpush.msra.mxu0 %v26
  %124 = vmatmul.f32.gmra.mxu0 %v85
  %v125 = vpop.f32.mrf.mxu0
  %v126 = vadd.f32 %v46, %v125
  %127 = vmatmul.f32.gmra.mxu0 %v88
  %v128 = vpop.f32.mrf.mxu0
  %v129 = vadd.f32 %v51, %v128
  %130 = vmatmul.f32.gmra.mxu0 %v91
  %v131 = vpop.f32.mrf.mxu0
  %v132 = vadd.f32 %v56, %v131
  %133 = vmatmul.f32.gmra.mxu0 %v94
  %v134 = vpop.f32.mrf.mxu0
  %v135 = vadd.f32 %v61, %v134
  %136 = vmatmul.f32.gmra.mxu0 %v97
  %v137 = vpop.f32.mrf.mxu0
  %v138 = vadd.f32 %v66, %v137
  %139 = vmatmul.f32.gmra.mxu0 %v100
  %v140 = vpop.f32.mrf.mxu0
  %v141 = vadd.f32 %v71, %v140
  %142 = vmatmul.f32.gmra.mxu0 %v103
  %v143 = vpop.f32.mrf.mxu0
  %v144 = vadd.f32 %v76, %v143
  %145 = vmatmul.f32.gmra.mxu0 %v106
  %v146 = vpop.f32.mrf.mxu0
  %v147 = vadd.f32 %v81, %v146
  %148 = vdwg.mxu0
  %v149 = vtanh.pop %v126
  %v150 = vtanh.pop %v129
  %v151 = vtanh.pop %v132
  %v152 = vtanh.pop %v135
  %v153 = vtanh.pop %v138
  %v154 = vtanh.pop %v141
  %v155 = vtanh.pop %v144
  %v156 = vtanh.pop %v147
  %v157 = vld [vmem:[%s3] sm:$0xff]
  %v158 = vld [vmem:[%s3 + $0x8] sm:$0xff]
  %v159 = vld [vmem:[%s3 + $0x10] sm:$0xff]
  %v160 = vld [vmem:[%s3 + $0x18] sm:$0xff]
  %v161 = vld [vmem:[%s3 + $0x20] sm:$0xff]
  %v162 = vld [vmem:[%s3 + $0x28] sm:$0xff]
  %v163 = vld [vmem:[%s3 + $0x30] sm:$0xff]
  %v164 = vld [vmem:[%s3 + $0x38] sm:$0xff]
  %v165 = vld [vmem:[%s4] sm:$0xff]
  %v166 = vld [vmem:[%s4 + $0x8] sm:$0xff]
  %v167 = vld [vmem:[%s4 + $0x10] sm:$0xff]
  %v168 = vld [vmem:[%s4 + $0x18] sm:$0xff]
  %v169 = vld [vmem:[%s4 + $0x20] sm:$0xff]
  %v170 = vld [vmem:[%s4 + $0x28] sm:$0xff]
  %v171 = vld [vmem:[%s4 + $0x30] sm:$0xff]
  %v172 = vld [vmem:[%s4 + $0x38] sm:$0xff]
  %174 = vset.pattern.permute.xlu0 0
  %175 = vperm.xlu0 %174, %v165
  %v176 = vpop.permute.xlu0 %175
  %179 = vset.pattern.permute.xlu0 0
  %180 = vperm.xlu0 %179, %v166
  %v181 = vpop.permute.xlu0 %180
  %184 = vset.pattern.permute.xlu0 0
  %185 = vperm.xlu0 %184, %v167
  %v186 = vpop.permute.xlu0 %185
  %189 = vset.pattern.permute.xlu0 0
  %190 = vperm.xlu0 %189, %v168
  %v191 = vpop.permute.xlu0 %190
  %194 = vset.pattern.permute.xlu0 0
  %195 = vperm.xlu0 %194, %v169
  %v196 = vpop.permute.xlu0 %195
  %199 = vset.pattern.permute.xlu0 0
  %200 = vperm.xlu0 %199, %v170
  %v201 = vpop.permute.xlu0 %200
  %204 = vset.pattern.permute.xlu0 0
  %205 = vperm.xlu0 %204, %v171
  %v206 = vpop.permute.xlu0 %205
  %209 = vset.pattern.permute.xlu0 0
  %210 = vperm.xlu0 %209, %v172
  %v211 = vpop.permute.xlu0 %210
  %vm213 = vcmask 523264
  %v215 = vsel %vm213, %v157, 0
  %v218 = vsel %vm213, %v158, 0
  %v221 = vsel %vm213, %v159, 0
  %v224 = vsel %vm213, %v160, 0
  %v227 = vsel %vm213, %v161, 0
  %v230 = vsel %vm213, %v162, 0
  %v233 = vsel %vm213, %v163, 0
  %v236 = vsel %vm213, %v164, 0
  %238 = vmatpush.msra.mxu0 0.0
  %239 = vmatpush.msra.mxu0 0.0
  %240 = vmatpush.msra.mxu0 0.0
  %241 = vmatpush.msra.mxu0 0.0
  %242 = vmatpush.msra.mxu0 0.0
  %243 = vmatpush.msra.mxu0 0.0
  %244 = vmatpush.msra.mxu0 0.0
  %245 = vmatpush.msra.mxu0 0.0
  %246 = vmatpush.msra.mxu0 %v156
  %247 = vmatpush.msra.mxu0 %v155
  %248 = vmatpush.msra.mxu0 %v154
  %249 = vmatpush.msra.mxu0 %v153
  %250 = vmatpush.msra.mxu0 %v152
  %251 = vmatpush.msra.mxu0 %v151
  %252 = vmatpush.msra.mxu0 %v150
  %253 = vmatpush.msra.mxu0 %v149
  %254 = vmatmul.f32.gmra.mxu0 %v215
  %v255 = vpop.f32.mrf.mxu0
  %v256 = vadd.f32 %v176, %v255
  %257 = vmatmul.f32.gmra.mxu0 %v218
  %v258 = vpop.f32.mrf.mxu0
  %v259 = vadd.f32 %v181, %v258
  %260 = vmatmul.f32.gmra.mxu0 %v221
  %v261 = vpop.f32.mrf.mxu0
  %v262 = vadd.f32 %v186, %v261
  %263 = vmatmul.f32.gmra.mxu0 %v224
  %v264 = vpop.f32.mrf.mxu0
  %v265 = vadd.f32 %v191, %v264
  %266 = vmatmul.f32.gmra.mxu0 %v227
  %v267 = vpop.f32.mrf.mxu0
  %v268 = vadd.f32 %v196, %v267
  %269 = vmatmul.f32.gmra.mxu0 %v230
  %v270 = vpop.f32.mrf.mxu0
  %v271 = vadd.f32 %v201, %v270
  %272 = vmatmul.f32.gmra.mxu0 %v233
  %v273 = vpop.f32.mrf.mxu0
  %v274 = vadd.f32 %v206, %v273
  %275 = vmatmul.f32.gmra.mxu0 %v236
  %v276 = vpop.f32.mrf.mxu0
  %v277 = vadd.f32 %v211, %v276
  %278 = vdwg.mxu0
  %v279 = vtanh.pop %v256
  %v280 = vtanh.pop %v259
  %v281 = vtanh.pop %v262
  %v282 = vtanh.pop %v265
  %v283 = vtanh.pop %v268
  %v284 = vtanh.pop %v271
  %v285 = vtanh.pop %v274
  %v286 = vtanh.pop %v277
  %v287 = vld [vmem:[%s5] sm:$0xff]
  %v288 = vld [vmem:[%s6] sm:$0xff]
  %290 = vset.pattern.permute.xlu0 0
  %291 = vperm.xlu0 %290, %v288
  %v292 = vpop.permute.xlu0 %291
  %v295 = vsel %vm213, %v287, 0
  %297 = vmatpush.msra.mxu0 0.0
  %298 = vmatpush.msra.mxu0 0.0
  %299 = vmatpush.msra.mxu0 0.0
  %300 = vmatpush.msra.mxu0 0.0
  %301 = vmatpush.msra.mxu0 0.0
  %302 = vmatpush.msra.mxu0 0.0
  %303 = vmatpush.msra.mxu0 0.0
  %304 = vmatpush.msra.mxu0 0.0
  %305 = vmatpush.msra.mxu0 %v286
  %306 = vmatpush.msra.mxu0 %v285
  %307 = vmatpush.msra.mxu0 %v284
  %308 = vmatpush.msra.mxu0 %v283
  %309 = vmatpush.msra.mxu0 %v282
  %310 = vmatpush.msra.mxu0 %v281
  %311 = vmatpush.msra.mxu0 %v280
  %312 = vmatpush.msra.mxu0 %v279
  %313 = vmatmul.f32.gmra.mxu0 %v295
  %v314 = vpop.f32.mrf.mxu0
  %v315 = vadd.f32 %v292, %v314
  %316 = vdwg.mxu0
  %317 = vst [vmem:[%s7] sm:$0xff] %v315
  // Predicated region
  $region30: #{model_forward.1} parent=0 // pred_check
    _
  $region31: #{model_forward.1} parent=0 // pred_check_branch
    %319 = sbr.rel (0) target = $region33
  $region32: #{model_forward.1} parent=0 // pred_region
    _
  $region33: #{model_forward.1} parent=0 // pred_fallthru
    _
  // Predicated region
  $region34: #{model_forward.1} parent=0 // pred_check
    _
  $region35: #{model_forward.1} parent=0 // pred_check_branch
    %321 = sbr.rel (0) target = $region37
  $region36: #{model_forward.1} parent=0 // pred_region
    _
  $region37: #{model_forward.1} parent=0 // pred_fallthru
    _

</llo_original>
